<compile_context>
chip_gen: v7x
topology: tpu7x:2x2x1
jax: 0.10.0
libtpu: 0.0.40
codegen_flags: <defaults>
</compile_context>

<pallas_src>
import functools

import jax
import jax.numpy as jnp
from jax.experimental import pallas as pl
from jax.experimental.pallas import tpu as pltpu

ALPHA = 1.0
GAMMA = 2.0  # applied as an explicit square below (compile-time constant)

_TARGET_TILE_BYTES = 2 * 1024 * 1024   # f32 working-set budget per logits tile
_MAX_TILE_N = 1024                     # 512-1024 rows ~ 85% of HBM roofline already
_SMALL_PROBLEM_ELEMS = 1 << 16         # below this, fused JAX beats kernel overhead


def _round_up(x, m):
    return ((x + m - 1) // m) * m


def _pick_tile_n(n, c):
    # Budget with lane padding (last dim padded to 128) at f32 working precision,
    # since the in-kernel intermediates are f32 regardless of input dtype.
    c_pad = _round_up(c, 128)
    rows = _TARGET_TILE_BYTES // (c_pad * 4)
    rows = max(8, (rows // 8) * 8)
    rows = min(rows, _MAX_TILE_N)
    return min(rows, _round_up(n, 8))


def focal_loss_kernel(logits_ref, targets_ref, out_ref, *, n_true):
    i = pl.program_id(0)

    logits = logits_ref[...].astype(jnp.float32)   # (T, C) f32 working precision
    tgt = targets_ref[...]                         # (T, 1) int32
    t, c = logits.shape

    # Numerically-stable log-softmax pieces — one (T,C) exp pass, one (T,C) select.
    m = jnp.max(logits, axis=-1, keepdims=True)                       # (T, 1)
    shifted = logits - m                                              # (T, C)
    sumexp = jnp.sum(jnp.exp(shifted), axis=-1, keepdims=True)        # (T, 1)

    # Gather target column via one-hot compare (no per-row dynamic gather).
    col = jax.lax.broadcasted_iota(jnp.int32, (t, c), 1)              # (T, C)
    onehot = col == tgt                                               # (T, C) bool
    tgt_shift = jnp.sum(jnp.where(onehot, shifted, 0.0),
                        axis=-1, keepdims=True)                       # logit[tgt] - m

    # ce = logsumexp - logit[tgt] >= 0;  pt = exp(-ce) <= 1 (exact, per-row EUP op).
    ce = jnp.log(sumexp) - tgt_shift                                  # (T, 1)
    pt = jnp.exp(-ce)                                                 # (T, 1)
    one_m_pt = 1.0 - pt
    focal = ALPHA * one_m_pt * one_m_pt * ce                          # explicit square

    # Mask padded rows of the last partial tile, reduce tile to one partial sum.
    row = jax.lax.broadcasted_iota(jnp.int32, (t, 1), 0) + i * t
    valid = row < n_true
    tile_sum = jnp.sum(jnp.where(valid, focal, 0.0))

    # Lane-aligned per-tile partial sum (independent across grid steps -> parallel).
    out_ref[...] = jnp.broadcast_to(tile_sum, out_ref.shape)


def focal_loss_pallas(logits, targets, *, tile_n=None):
    """logits: (N, C) float32/bfloat16, targets: (N,) int. Returns scalar mean focal loss."""
    n, c = logits.shape
    if tile_n is None:
        tile_n = _pick_tile_n(n, c)
    tile_n = max(8, _round_up(tile_n, 8))
    n_pad = _round_up(n, tile_n)
    if n_pad != n:
        logits = jnp.pad(logits, ((0, n_pad - n), (0, 0)))
        targets = jnp.pad(targets, (0, n_pad - n))
    targets2d = targets.astype(jnp.int32).reshape(n_pad, 1)
    num_tiles = n_pad // tile_n

    partials = pl.pallas_call(
        functools.partial(focal_loss_kernel, n_true=n),
        out_shape=jax.ShapeDtypeStruct((num_tiles, 8, 128), jnp.float32),
        grid_spec=pltpu.PrefetchScalarGridSpec(
            num_scalar_prefetch=0,
            grid=(num_tiles,),
            in_specs=[
                pl.BlockSpec((tile_n, c), lambda i: (i, 0)),   # logits row-tile
                pl.BlockSpec((tile_n, 1), lambda i: (i, 0)),   # targets row-tile
            ],
            out_specs=pl.BlockSpec((1, 8, 128), lambda i: (i, 0, 0)),
        ),
        compiler_params=pltpu.CompilerParams(
            dimension_semantics=("parallel",),     # independent tiles; v7x dual-TC shards
            vmem_limit_bytes=32 * 1024 * 1024,
        ),
    )(logits, targets2d)

    # Final tree reduction of per-tile partial sums + mean, in the wrapper.
    return jnp.sum(partials[:, 0, 0]) / jnp.float32(n)


def focal_loss_ref(logits, targets):
    # Pure-JAX reference matching F.cross_entropy(reduction='none') semantics.
    logp = jax.nn.log_softmax(logits.astype(jnp.float32), axis=-1)
    ce = -jnp.take_along_axis(logp, targets[:, None], axis=-1)[:, 0]
    pt = jnp.exp(-ce)
    return jnp.mean(ALPHA * (1.0 - pt) ** GAMMA * ce)


def focal_loss(logits, targets):
    """Dispatcher: fused JAX for tiny problems (lane-padding / grid-overhead bound),
    Pallas streaming kernel otherwise."""
    n, c = logits.shape
    if n * _round_up(c, 128) < _SMALL_PROBLEM_ELEMS:
        return focal_loss_ref(logits, targets)
    return focal_loss_pallas(logits, targets)


if __name__ == "__main__":
    key = jax.random.PRNGKey(0)
    k1, k2, k3, k4 = jax.random.split(key, 4)

    # Small shapes consistent with the module: (N, C) logits, (N,) class indices.
    N, C = 8, 16
    logits = jax.random.normal(k1, (N, C), dtype=jnp.float32)
    targets = jax.random.randint(k2, (N,), 0, C, dtype=jnp.int32)

    out = jax.block_until_ready(focal_loss_pallas(logits, targets))
    ref = focal_loss_ref(logits, targets)
    assert jnp.allclose(out, ref, atol=1e-5, rtol=1e-5), (out, ref)

    # Multi-tile path: exercises grid pipelining + padded-row masking in the last tile.
    N2, C2 = 37, 16
    logits2 = jax.random.normal(k3, (N2, C2), dtype=jnp.float32)
    targets2 = jax.random.randint(k4, (N2,), 0, C2, dtype=jnp.int32)
    out2 = jax.block_until_ready(focal_loss_pallas(logits2, targets2, tile_n=8))
    ref2 = focal_loss_ref(logits2, targets2)
    assert jnp.allclose(out2, ref2, atol=1e-5, rtol=1e-5), (out2, ref2)

    # bf16 logits at the pallas_call boundary (halves HBM traffic); kernel upcasts,
    # so compare against the f32 reference on the same bf16-rounded values.
    logits_bf16 = logits.astype(jnp.bfloat16)
    out3 = jax.block_until_ready(focal_loss_pallas(logits_bf16, targets))
    ref3 = focal_loss_ref(logits_bf16.astype(jnp.float32), targets)
    assert jnp.allclose(out3, ref3, atol=1e-5, rtol=1e-5), (out3, ref3)

    # Dispatcher: tiny problem takes the fused-JAX path, same numerics.
    out4 = jax.block_until_ready(focal_loss(logits, targets))
    assert jnp.allclose(out4, ref, atol=1e-5, rtol=1e-5), (out4, ref)

    print("KERNEL_OK")
</pallas_src>

<mosaic_0001>
module attributes {stable_mosaic.version = 11 : i64} {
  func.func @focal_loss_kernel(%arg0: i32, %arg1: memref<8x16xf32, #tpu.memory_space<vmem>>, %arg2: memref<8x1xi32, #tpu.memory_space<vmem>>, %arg3: memref<1x8x128xf32, #tpu.memory_space<vmem>>) attributes {dimension_semantics = [#tpu.dimension_semantics<parallel>], iteration_bounds = array<i64: 1>, scalar_prefetch = 0 : i64, scratch_operands = 0 : i64, tpu.core_type = #tpu.core_type<tc>, window_params = [{transform_indices = @transform_0, window_bounds = array<i64: 8, 16>}, {transform_indices = @transform_1, window_bounds = array<i64: 8, 1>}, {transform_indices = @transform_2, window_bounds = array<i64: 1, 8, 128>}]} {
    %c0 = arith.constant 0 : index
    %c0_0 = arith.constant 0 : index
    %0 = vector.load %arg1[%c0, %c0_0] : memref<8x16xf32, #tpu.memory_space<vmem>>, vector<8x16xf32>
    %c0_1 = arith.constant 0 : index
    %c0_2 = arith.constant 0 : index
    %1 = vector.load %arg2[%c0_1, %c0_2] : memref<8x1xi32, #tpu.memory_space<vmem>>, vector<8x1xi32>
    %cst = arith.constant dense<0xFF800000> : vector<8xf32>
    %2 = vector.multi_reduction <maximumf>, %0, %cst [1] : vector<8x16xf32> to vector<8xf32>
    %3 = vector.shape_cast %2 : vector<8xf32> to vector<8x1xf32>
    %4 = vector.broadcast %3 : vector<8x1xf32> to vector<8x16xf32>
    %5 = arith.subf %0, %4 : vector<8x16xf32>
    %6 = math.exp %5 : vector<8x16xf32>
    %cst_3 = arith.constant dense<0.000000e+00> : vector<8xf32>
    %7 = vector.multi_reduction <add>, %6, %cst_3 [1] : vector<8x16xf32> to vector<8xf32>
    %8 = vector.shape_cast %7 : vector<8xf32> to vector<8x1xf32>
    %9 = tpu.iota {dimensions = array<i32: 1>} : vector<8x16xi32>
    %10 = vector.broadcast %1 : vector<8x1xi32> to vector<8x16xi32>
    %11 = arith.cmpi eq, %9, %10 : vector<8x16xi32>
    %cst_4 = arith.constant 0.000000e+00 : f32
    %12 = vector.broadcast %cst_4 : f32 to vector<8x16xf32>
    %13 = arith.select %11, %5, %12 : vector<8x16xi1>, vector<8x16xf32>
    %cst_5 = arith.constant dense<0.000000e+00> : vector<8xf32>
    %14 = vector.multi_reduction <add>, %13, %cst_5 [1] : vector<8x16xf32> to vector<8xf32>
    %15 = vector.shape_cast %14 : vector<8xf32> to vector<8x1xf32>
    %16 = math.log %8 : vector<8x1xf32>
    %17 = arith.subf %16, %15 : vector<8x1xf32>
    %cst_6 = arith.constant 0.000000e+00 : f32
    %18 = vector.broadcast %cst_6 : f32 to vector<8x1xf32>
    %19 = arith.subf %18, %17 : vector<8x1xf32>
    %20 = math.exp %19 : vector<8x1xf32>
    %cst_7 = arith.constant 1.000000e+00 : f32
    %21 = vector.broadcast %cst_7 : f32 to vector<8x1xf32>
    %22 = arith.subf %21, %20 : vector<8x1xf32>
    %cst_8 = arith.constant 1.000000e+00 : f32
    %23 = vector.broadcast %cst_8 : f32 to vector<8x1xf32>
    %24 = arith.mulf %23, %22 : vector<8x1xf32>
    %25 = arith.mulf %24, %22 : vector<8x1xf32>
    %26 = arith.mulf %25, %17 : vector<8x1xf32>
    %27 = tpu.iota {dimensions = array<i32: 0>} : vector<8x1xi32>
    %c8_i32 = arith.constant 8 : i32
    %28 = arith.muli %arg0, %c8_i32 : i32
    %29 = vector.broadcast %28 : i32 to vector<8x1xi32>
    %30 = arith.addi %27, %29 : vector<8x1xi32>
    %c8_i32_9 = arith.constant 8 : i32
    %31 = vector.broadcast %c8_i32_9 : i32 to vector<8x1xi32>
    %32 = arith.cmpi slt, %30, %31 : vector<8x1xi32>
    %cst_10 = arith.constant 0.000000e+00 : f32
    %33 = vector.broadcast %cst_10 : f32 to vector<8x1xf32>
    %34 = arith.select %32, %26, %33 : vector<8x1xi1>, vector<8x1xf32>
    %35 = vector.shape_cast %34 : vector<8x1xf32> to vector<1x8x1xf32>
    %cst_11 = arith.constant dense<0.000000e+00> : vector<1xf32>
    %36 = vector.multi_reduction <add>, %35, %cst_11 [1, 2] : vector<1x8x1xf32> to vector<1xf32>
    %37 = vector.shape_cast %36 : vector<1xf32> to vector<1x1x1xf32>
    %38 = vector.extract %37[0, 0, 0] : f32 from vector<1x1x1xf32>
    %39 = vector.broadcast %38 : f32 to vector<1x8x128xf32>
    %c0_12 = arith.constant 0 : index
    %c0_13 = arith.constant 0 : index
    %c0_14 = arith.constant 0 : index
    %40 = vector.load %arg3[%c0_12, %c0_13, %c0_14] : memref<1x8x128xf32, #tpu.memory_space<vmem>>, vector<1x8x128xf32>
    tpu.vector_store %arg3[%c0_12, %c0_13, %c0_14], %39 {strides = array<i32>} : memref<1x8x128xf32, #tpu.memory_space<vmem>>, vector<1x8x128xf32>,
    return
  }
  func.func @transform_0(%arg0: i32) -> (i32, i32) {
    %c0_i32 = arith.constant 0 : i32
    %c0_i32_0 = arith.constant 0 : i32
    return %arg0, %c0_i32 : i32, i32
  }
  func.func @transform_1(%arg0: i32) -> (i32, i32) {
    %c0_i32 = arith.constant 0 : i32
    %c0_i32_0 = arith.constant 0 : i32
    return %arg0, %c0_i32 : i32, i32
  }
  func.func @transform_2(%arg0: i32) -> (i32, i32, i32) {
    %c0_i32 = arith.constant 0 : i32
    %c0_i32_0 = arith.constant 0 : i32
    %c0_i32_1 = arith.constant 0 : i32
    return %arg0, %c0_i32, %c0_i32_0 : i32, i32, i32
  }
}

</mosaic_0001>

<llo_original>
// kernel: tpu_custom_call.1
$region0: #{tpu_custom_call.1}
  #allocation0 [shape = 'u32[]', space=smem, size = 0x4, offset = 0x4, fixed_abs, tag = 'smem constant byte address 0x4 - core index']
  #allocation1 [shape = 'u32[144,128]{1,0:T(1,128)}', space=vmem, size = 0x12000, scoped, tag = 'internal scratch']
  %s0 = inlined_call_operand.vmem [shape: f32[8,16], index: 0, kind: input, shape index: {}]
  %s1 = inlined_call_operand.vmem [shape: s32[8,1], index: 1, kind: input, shape index: {}]
  %s2 = inlined_call_operand.hbm [shape: f32[1,8,128], index: 2, kind: output, shape index: {}]
  %s3 = sld [smem:[#allocation0]]
  $region18: #{tpu_custom_call.1} parent=0
    _
  %s5 = ssub.s32 1, %s3
  %s6 = scalar_select 0, %s5, %s3
  $region1: #{tpu_custom_call.1} parent=0
    #allocation2 [shape = 'u8[4096]{0}', space=vmem, size = 0x1000, scoped, tag = 'output window, operand 0, single buffered']
    #allocation3 [shape = 's32[1]{0}', space=sflag, size = 0x4, scoped, tag = 'scoped memory for tpu_custom_call.1']
    %7 = vsyncpa [#allocation3], 0
    // Predicated region
    $region2: #{tpu_custom_call.1} parent=1 // pred_check
      _
    $region3: #{tpu_custom_call.1} parent=1 // pred_check_branch
      %9 = sbr.rel (0) target = $region5
    $region4: #{tpu_custom_call.1} parent=1 // pred_region
      _
    $region5: #{tpu_custom_call.1} parent=1 // pred_fallthru
      _
    // Predicated region
    $region6: #{tpu_custom_call.1} parent=1 // pred_check
      _
    $region7: #{tpu_custom_call.1} parent=1 // pred_check_branch
      %11 = sbr.rel (0) target = $region9
    $region8: #{tpu_custom_call.1} parent=1 // pred_region
      _
    $region9: #{tpu_custom_call.1} parent=1 // pred_fallthru
      _
    %v12 = vld [vmem:[%s0] sm:$0xff]
    %v13 = vld [vmem:[%s1] sm:$0xff]
    %vm14 = vcmask 130048
    %v15 = vsel %vm14, %v12, -inf
    %16 = vmax.xlane.f32.xlu0 %v15
    %v17 = vpop.xlane.xlu0 %16
    %v18 = vsub.f32 %v12, %v17
    %v19 = vmul.f32 %v18, 1.442695
    %v20 = vpow.pop %v19
    %v21 = vsel %vm14, %v20, 0.0
    %22 = vadd.xlane.f32.xlu0 %v21
    %v23 = vpop.xlane.xlu0 %22
    %v24 = vlaneseq
    %v25 = vand.u32 %v24, 127
    %26 = vset.pattern.permute.xlu0 0
    %27 = vperm.xlu0 %26, %v13
    %v28 = vpop.permute.xlu0 %27
    %vm29 = vcmp.eq.s32.totalorder %v25, %v28
    %v30 = vsel %vm29, %v18, 0.0
    %v31 = vsel %vm14, %v30, 0.0
    %32 = vadd.xlane.f32.xlu0 %v31
    %v33 = vpop.xlane.xlu0 %32
    %v34 = vlog2.pop %v23
    %v35 = vmul.f32 %v34, 0.6931472
    %v36 = vsub.f32 %v35, %v33
    %v37 = vsub.f32 0.0, %v36
    %v38 = vmul.f32 %v37, 1.442695
    %v39 = vpow.pop %v38
    %v40 = vsub.f32 1.0, %v39
    %v41 = vmul.f32 %v40, %v40
    %v42 = vmul.f32 %v41, %v36
    %v43 = vlaneseq
    %v44 = vshrl.u32 %v43, 7
    %s45 = smul.u32 0, 8
    %v46 = vstv %s45
    %v47 = vadd.s32 %v44, %v46
    %vm48 = vcmp.lt.s32.totalorder %v47, 8
    %v49 = vsel %vm48, %v42, 0.0
    %vm50 = vcmask 7168
    %v51 = vsel %vm50, %v49, 0.0
    %52 = vadd.xlane.f32.xlu0 %v51
    %v53 = vpop.xlane.xlu0 %52
    %v54 = vrot.slane %v53, 4
    %v55 = vadd.f32 %v53, %v54
    %v56 = vrot.slane %v55, 2
    %v57 = vadd.f32 %v55, %v56
    %v58 = vrot.slane %v57, 1
    %v59 = vadd.f32 %v57, %v58
    %s60 = vtos %v59
    %v61 = vstv %s60
    %62 = vst [vmem:[#allocation2] sm:$0xff] %v61
    // Predicated region
    $region10: #{tpu_custom_call.1} parent=1 // pred_check
      _
    $region11: #{tpu_custom_call.1} parent=1 // pred_check_branch
      %64 = sbr.rel (0) target = $region13
    $region12: #{tpu_custom_call.1} parent=1 // pred_region
      %s66 = ssub.s32 128, 128
      %67 = vsyncadd [#allocation3], %s66
      %s69 = sshll.u32 [#allocation2], 4
      %s70 = int_to_ptr.vmem [resolvable:$true] %s69
      %72 = dma.vmem_to_hbm [thread:$0]  %s70, 128, %s2, [#allocation3]
    $region13: #{tpu_custom_call.1} parent=1 // pred_fallthru
      _
    // Predicated region
    $region14: #{tpu_custom_call.1} parent=1 // pred_check
      _
    $region15: #{tpu_custom_call.1} parent=1 // pred_check_branch
      %74 = sbr.rel (0) target = $region17
    $region16: #{tpu_custom_call.1} parent=1 // pred_region
      %75 = dma.done [#allocation3], 128
    $region17: #{tpu_custom_call.1} parent=1 // pred_fallthru
      _
    %76 = vsyncpa [#allocation3], 1

</llo_original>
